<compile_context>
chip_gen: v7x
topology: tpu7x:2x2x1
jax: 0.10.0
libtpu: 0.0.40
codegen_flags: <defaults>
</compile_context>

<pallas_src>
import jax
import jax.numpy as jnp
from jax.experimental import pallas as pl
from jax.experimental.pallas import tpu as pltpu


# --------------------------------------------------------------------------- #
# Kernels
# --------------------------------------------------------------------------- #
def proj_kernel(x_ref, w_ref, xw_ref):
    """xw[b, l_tile] = x[b, l_tile] @ Wcat.

    Wcat's BlockSpec has a constant block index, so Pallas DMAs it into VMEM
    exactly once at the pipeline prologue and never re-issues the copy."""
    xw_ref[0] = jnp.dot(
        x_ref[0], w_ref[...], preferred_element_type=jnp.float32
    ).astype(xw_ref.dtype)


def sic_kernel(start_ref, end_ref, xw_ref, bias_ref, o_ref):
    """Span interaction for one (batch, S-tile): 3 one-hot selection matmuls
    over the precomputed xw = x @ [W1|W4|W2|W3] slabs, bias fold, product, tanh."""
    tS = start_ref.shape[0]
    L = xw_ref.shape[1]
    H = xw_ref.shape[2] // 4
    cdt = xw_ref.dtype

    # One-hot selection matrices for THIS tile only: [tS, L].
    iota_l = jax.lax.broadcasted_iota(jnp.int32, (tS, L), 1)
    sel_s = (iota_l == start_ref[...]).astype(cdt)
    sel_e = (iota_l == end_ref[...]).astype(cdt)
    sel_d = sel_s - sel_e                       # values in {-1, 0, 1}: exact in bf16

    xw = xw_ref[0]                              # [L, 4H] = [W1 | W4 | W2 | W3]
    a = jnp.dot(sel_s, xw[:, 0:2 * H],
                preferred_element_type=jnp.float32)      # [W1_hi | W4_hi]
    bm = jnp.dot(sel_e, xw[:, H:3 * H],
                 preferred_element_type=jnp.float32)     # [W4_hj | W2_hj]
    d = jnp.dot(sel_d, xw[:, 3 * H:4 * H],
                preferred_element_type=jnp.float32)      # W3_hi - W3_hj (b3 cancels)

    b12 = bias_ref[0:1, :]     # b1 + b2, added once post-gather
    b4 = bias_ref[1:2, :]      # b4

    w1_hi = a[:, 0:H]
    w4_hi = a[:, H:2 * H]
    w4_hj = bm[:, 0:H]
    w2_hj = bm[:, H:2 * H]

    span = w1_hi + w2_hj + b12 + d + (w4_hi + b4) * (w4_hj + b4)
    o_ref[0] = jnp.tanh(span).astype(o_ref.dtype)


# --------------------------------------------------------------------------- #
# Parameter prep & wrappers
# --------------------------------------------------------------------------- #
def prepare_params(weights, biases, compute_dtype=jnp.bfloat16):
    """One-time parameter prep (keep OUTSIDE any per-step jit).

    weights: [4, H, H] in nn.Linear layout [out, in]; biases: [4, H].
    Returns Wcat [H, 4H] with column order [W1 | W4 | W2 | W3] (so the two
    selection slabs [0:2H] and [H:3H] are contiguous) and bias2 [2, H] =
    stack(b1 + b2, b4) in f32."""
    w1t, w2t, w3t, w4t = (jnp.transpose(weights[i]) for i in range(4))
    wcat = jnp.concatenate([w1t, w4t, w2t, w3t], axis=1).astype(compute_dtype)
    bias2 = jnp.stack([biases[0] + biases[1], biases[3]], axis=0).astype(jnp.float32)
    return wcat, bias2


def _vmem_limit(per_step_bytes):
    """Per-step footprint + headroom, clamped to [32 MiB, 64 MiB] so the budget
    is valid on v7x's 64 MiB physical VMEM as well as v5e/v6e's 128 MiB."""
    return int(min(max(int(per_step_bytes * 1.5) + (2 << 20), 32 << 20), 64 << 20))


def _project(x, wcat, *, tile_l=512):
    """xw = x @ Wcat via a small pallas_call with both grid axes 'parallel'."""
    B, L, H = x.shape
    H4 = wcat.shape[1]
    csz = jnp.dtype(x.dtype).itemsize

    tL = min(tile_l, L)
    if L % tL != 0 or tL % 8 != 0:
        tL = L                      # fall back to a full-length block
    n_l = L // tL

    per_step = (2 * tL * H * csz + 2 * H * H4 * csz + 2 * tL * H4 * csz
                + tL * H4 * 4)
    flops = int(2 * B * L * H * H4)
    bytes_accessed = int(B * L * H * csz + H * H4 * csz + B * L * H4 * csz)

    return pl.pallas_call(
        proj_kernel,
        out_shape=jax.ShapeDtypeStruct((B, L, H4), x.dtype),
        grid=(B, n_l),
        in_specs=[
            pl.BlockSpec((1, tL, H), lambda b, l: (b, l, 0)),   # x tile
            pl.BlockSpec((H, H4), lambda b, l: (0, 0)),         # Wcat: single prologue DMA
        ],
        out_specs=pl.BlockSpec((1, tL, H4), lambda b, l: (b, l, 0)),
        compiler_params=pltpu.CompilerParams(
            dimension_semantics=("parallel", "parallel"),
            vmem_limit_bytes=_vmem_limit(per_step)),
        cost_estimate=pl.CostEstimate(flops=flops, transcendentals=0,
                                      bytes_accessed=bytes_accessed),
    )(x, wcat)


def sic_forward(hidden_states, start_indexs, end_indexs, wcat, bias2, *,
                tile_s=512, tile_l=512, compute_dtype=jnp.bfloat16,
                out_dtype=None):
    """hidden_states: [B, L, H]; start/end_indexs: [S] int32, must be in [0, L)
    (out-of-range values silently select nothing, unlike torch.index_select);
    wcat: [H, 4H], bias2: [2, H] from prepare_params."""
    B, L, H = hidden_states.shape
    S = start_indexs.shape[0]
    H4 = 4 * H
    assert wcat.shape == (H, H4), wcat.shape
    assert bias2.shape == (2, H), bias2.shape
    if out_dtype is None:
        out_dtype = compute_dtype
    # NOTE: for production, H should be a multiple of 128 so the xw slab slices
    # land on lane boundaries (zero-copy). BERT's H=768 is fine.

    csz = jnp.dtype(compute_dtype).itemsize
    osz = jnp.dtype(out_dtype).itemsize

    # S tile: multiple of 8 (sublane); default 512 is a multiple of 256 (MXU).
    s_round = pl.cdiv(S, 8) * 8
    tS = max(8, (min(tile_s, s_round) // 8) * 8)
    n_s = pl.cdiv(S, tS)
    S_pad = n_s * tS
    pad = S_pad - S

    start2d = jnp.pad(start_indexs.astype(jnp.int32), (0, pad)).reshape(S_pad, 1)
    end2d = jnp.pad(end_indexs.astype(jnp.int32), (0, pad)).reshape(S_pad, 1)
    x = hidden_states.astype(compute_dtype)

    # Fused projection (separate pallas_call -> no scratch carry in the main
    # kernel, so both of its grid axes can be megacore-parallel).
    xw = _project(x, wcat, tile_l=tile_l)

    per_step = (2 * L * H4 * csz           # xw block, double-buffered
                + 2 * tS * H * osz         # output block, double-buffered
                + 4 * tS * 4 + 4 * H * 4   # index tiles + bias
                + 3 * tS * L * csz         # sel_s / sel_e / sel_d
                + 2 * tS * 2 * H * 4       # a, bm (f32)
                + 4 * tS * H * 4)          # d + combine temporaries
    flops = int(2 * B * 5 * S_pad * L * H)
    transcendentals = int(B * S_pad * H)
    bytes_accessed = int(B * L * H4 * csz + B * S_pad * H * osz
                         + 2 * S_pad * 4 + 2 * H * 4)

    out = pl.pallas_call(
        sic_kernel,
        out_shape=jax.ShapeDtypeStruct((B, S_pad, H), out_dtype),
        grid=(B, n_s),
        in_specs=[
            pl.BlockSpec((tS, 1), lambda b, s: (s, 0)),         # start-index tile
            pl.BlockSpec((tS, 1), lambda b, s: (s, 0)),         # end-index tile
            pl.BlockSpec((1, L, H4), lambda b, s: (b, 0, 0)),   # xw (per batch)
            pl.BlockSpec((2, H), lambda b, s: (0, 0)),          # [b1+b2 ; b4]
        ],
        out_specs=pl.BlockSpec((1, tS, H), lambda b, s: (b, s, 0)),
        compiler_params=pltpu.CompilerParams(
            dimension_semantics=("parallel", "parallel"),
            vmem_limit_bytes=_vmem_limit(per_step)),
        cost_estimate=pl.CostEstimate(flops=flops,
                                      transcendentals=transcendentals,
                                      bytes_accessed=bytes_accessed),
    )(start2d, end2d, xw, bias2)
    return out[:, :S, :]


# --------------------------------------------------------------------------- #
# Pure-JAX reference (mirrors the PyTorch forward, f32)
# --------------------------------------------------------------------------- #
def sic_reference(hidden_states, start_indexs, end_indexs, weights, biases):
    def lin(i):
        return jnp.einsum("blh,oh->blo", hidden_states, weights[i]) + biases[i]
    w1h, w2h, w3h, w4h = lin(0), lin(1), lin(2), lin(3)
    w1_hi = w1h[:, start_indexs, :]
    w2_hj = w2h[:, end_indexs, :]
    w3_hi = w3h[:, start_indexs, :]
    w3_hj = w3h[:, end_indexs, :]
    w4_hi = w4h[:, start_indexs, :]
    w4_hj = w4h[:, end_indexs, :]
    span = w1_hi + w2_hj + (w3_hi - w3_hj) + w4_hi * w4_hj
    return jnp.tanh(span)


if __name__ == "__main__":
    B, L, H = 2, 8, 32  # batch, seq len, hidden_size

    key = jax.random.PRNGKey(0)
    k_hs, k_w, k_b = jax.random.split(key, 3)

    hidden_states = jax.random.normal(k_hs, (B, L, H), dtype=jnp.float32)
    # 4 Linear(H, H) layers in PyTorch layout [out, in].
    weights = jax.random.normal(k_w, (4, H, H), dtype=jnp.float32) * 0.1
    biases = jax.random.normal(k_b, (4, H), dtype=jnp.float32) * 0.1

    # Span (start, end) index pairs with start <= end, as in the Self-Explain model.
    pairs = [(i, j) for i in range(L) for j in range(i, min(i + 3, L))][:10]
    start_indexs = jnp.array([p[0] for p in pairs], dtype=jnp.int32)
    end_indexs = jnp.array([p[1] for p in pairs], dtype=jnp.int32)
    S = len(pairs)

    ref = sic_reference(hidden_states, start_indexs, end_indexs, weights, biases)

    # f32 path (test-only): tight numerical check vs the reference.
    wcat32, bias2 = prepare_params(weights, biases, compute_dtype=jnp.float32)
    out32 = sic_forward(hidden_states, start_indexs, end_indexs, wcat32, bias2,
                        tile_s=8, compute_dtype=jnp.float32,
                        out_dtype=jnp.float32)
    out32 = jax.block_until_ready(out32)
    assert out32.shape == (B, S, H), out32.shape
    assert jnp.allclose(out32, ref, atol=1e-5, rtol=1e-5), "f32 mismatch vs reference"

    # Production path: bf16 operands + f32 MXU accumulation, bf16 output.
    wcat16, bias2 = prepare_params(weights, biases, compute_dtype=jnp.bfloat16)
    out16 = sic_forward(hidden_states, start_indexs, end_indexs, wcat16, bias2,
                        tile_s=8, compute_dtype=jnp.bfloat16)
    out16 = jax.block_until_ready(out16)
    assert out16.shape == (B, S, H), out16.shape
    assert out16.dtype == jnp.bfloat16, out16.dtype
    assert jnp.allclose(out16.astype(jnp.float32), ref, atol=5e-2, rtol=5e-2), \
        "bf16 mismatch vs reference"

    print("KERNEL_OK")
</pallas_src>

<mosaic_0001>
module attributes {stable_mosaic.version = 11 : i64} {
  func.func @proj_kernel(%arg0: i32, %arg1: i32, %arg2: memref<1x8x32xf32, #tpu.memory_space<vmem>>, %arg3: memref<32x128xf32, #tpu.memory_space<vmem>>, %arg4: memref<1x8x128xf32, #tpu.memory_space<vmem>>) attributes {dimension_semantics = [#tpu.dimension_semantics<parallel>, #tpu.dimension_semantics<parallel>], iteration_bounds = array<i64: 2, 1>, scalar_prefetch = 0 : i64, scratch_operands = 0 : i64, tpu.core_type = #tpu.core_type<tc>, window_params = [{transform_indices = @transform_0, window_bounds = array<i64: 1, 8, 32>}, {pipeline_mode = #tpu.pipeline_mode<synchronous>, transform_indices = @transform_1, window_bounds = array<i64: 32, 128>}, {transform_indices = @transform_2, window_bounds = array<i64: 1, 8, 128>}]} {
    %c0 = arith.constant 0 : index
    %c0_0 = arith.constant 0 : index
    %c0_1 = arith.constant 0 : index
    %0 = vector.load %arg2[%c0, %c0_0, %c0_1] : memref<1x8x32xf32, #tpu.memory_space<vmem>>, vector<1x8x32xf32>
    %1 = vector.shape_cast %0 : vector<1x8x32xf32> to vector<8x32xf32>
    %c0_2 = arith.constant 0 : index
    %c0_3 = arith.constant 0 : index
    %2 = vector.load %arg3[%c0_2, %c0_3] : memref<32x128xf32, #tpu.memory_space<vmem>>, vector<32x128xf32>
    %cst = arith.constant dense<0.000000e+00> : vector<8x128xf32>
    %3 = tpu.matmul %1, %2, %cst {dimension_numbers = #tpu.dot_dimension_numbers<[1], [0], [0], [1], [0, 0, 1, 1], [], []>} : vector<8x32xf32>, vector<32x128xf32>, vector<8x128xf32> -> vector<8x128xf32>
    %c0_4 = arith.constant 0 : index
    %c0_5 = arith.constant 0 : index
    %c0_6 = arith.constant 0 : index
    %4 = vector.load %arg4[%c0_4, %c0_5, %c0_6] : memref<1x8x128xf32, #tpu.memory_space<vmem>>, vector<1x8x128xf32>
    %5 = vector.shape_cast %4 : vector<1x8x128xf32> to vector<8x128xf32>
    %6 = vector.shape_cast %3 : vector<8x128xf32> to vector<1x8x128xf32>
    tpu.vector_store %arg4[%c0_4, %c0_5, %c0_6], %6 {strides = array<i32>} : memref<1x8x128xf32, #tpu.memory_space<vmem>>, vector<1x8x128xf32>,
    return
  }
  func.func @transform_0(%arg0: i32, %arg1: i32) -> (i32, i32, i32) {
    %c0_i32 = arith.constant 0 : i32
    %c0_i32_0 = arith.constant 0 : i32
    return %arg0, %arg1, %c0_i32 : i32, i32, i32
  }
  func.func @transform_1(%arg0: i32, %arg1: i32) -> (i32, i32) {
    %c0_i32 = arith.constant 0 : i32
    %c0_i32_0 = arith.constant 0 : i32
    %c0_i32_1 = arith.constant 0 : i32
    return %c0_i32, %c0_i32_0 : i32, i32
  }
  func.func @transform_2(%arg0: i32, %arg1: i32) -> (i32, i32, i32) {
    %c0_i32 = arith.constant 0 : i32
    %c0_i32_0 = arith.constant 0 : i32
    return %arg0, %arg1, %c0_i32 : i32, i32, i32
  }
}

</mosaic_0001>

<llo_original>
// kernel: tpu_custom_call.1
$region0: #{tpu_custom_call.1}
  #allocation0 [shape = 'u32[]', space=smem, size = 0x4, offset = 0x4, fixed_abs, tag = 'smem constant byte address 0x4 - core index']
  #allocation1 [shape = 'u32[144,128]{1,0:T(1,128)}', space=vmem, size = 0x12000, scoped, tag = 'internal scratch']
  %s0 = inlined_call_operand.hbm [shape: f32[2,8,32], index: 0, kind: input, shape index: {}]
  %s1 = inlined_call_operand.hbm [shape: f32[32,128], index: 1, kind: input, shape index: {}]
  %s2 = inlined_call_operand.hbm [shape: f32[2,8,128], index: 2, kind: output, shape index: {}]
  %s3 = sld [smem:[#allocation0]]
  $region49: #{tpu_custom_call.1} parent=0
    _
  %s5 = ssub.s32 1, %s3
  %s6 = scalar_select 0, %s5, %s3
  $region1: #{tpu_custom_call.1} parent=0
    #allocation2 [shape = 'u8[8192]{0}', space=vmem, size = 0x2000, scoped, tag = 'input window, operand 0']
    #allocation3 [shape = 's32[2]{0}', space=sflag, size = 0x8, scoped, tag = 'scoped memory for tpu_custom_call.1']
    #allocation4 [shape = 's32[2]{0}', space=sflag, size = 0x8, scoped, tag = 'scoped memory for tpu_custom_call.1']
    #allocation5 [shape = 'u8[16384]{0}', space=vmem, size = 0x4000, scoped, tag = 'input window, operand 1, single buffered']
    #allocation6 [shape = 's32[1]{0}', space=sflag, size = 0x4, scoped, tag = 'scoped memory for tpu_custom_call.1']
    #allocation7 [shape = 'u8[8192]{0}', space=vmem, size = 0x2000, scoped, tag = 'output window, operand 0']
    %7 = vsyncpa [#allocation3], 0
    %s8 = scalar_lea.sflag [#allocation3], 1
    %9 = vsyncpa %s8, 0
    %10 = vsyncpa [#allocation6], 0
    %11 = vsyncpa [#allocation4], 0
    %s12 = scalar_lea.sflag [#allocation4], 1
    %13 = vsyncpa %s12, 0
    loop: start=0, step=1, limit=4
    $region2: #{tpu_custom_call.1} parent=1 // loop_pre_header
      _
    $region3: #{tpu_custom_call.1} parent=1 // loop_header
      %s15 = sphi 0, %s19
      %p16 = scmp.ge.s32.totalorder %s15, 4
      %s22 = sphi 0, %s34
      %s23 = sphi 0, %s30
      %s24 = sphi 0, %s22
      %s25 = sphi 0, %s23
      %s26 = sphi 0, %s24
      %s27 = sphi 0, %s25
      %s39 = sphi 0, %s41
      %s42 = sphi 0, %s39
      %s43 = sphi 0, %s42
      %s59 = sphi 0, %s43
      %s63 = sphi 0, %s63
      %s65 = sphi 0, %s63
      %s66 = sphi 0, %s65
      %s80 = sphi 0, %s66
      %s88 = sphi 0, %s90
      %s91 = sphi 0, %s88
      %s92 = sphi 0, %s91
      %s108 = sphi 0, %s92
    $region4: #{tpu_custom_call.1} parent=1 // loop_header_branch
      %18 = sbr.rel (%p16) target = $region8
    $region5: #{tpu_custom_call.1} parent=1 // loop_body
      %s20 = ssub.s32 %s15, 1
      %s21 = ssub.s32 %s15, 2
      %s28 = sadd.s32 1, %s23
      %p29 = scmp.ge.s32.totalorder %s28, 1
      %s30 = scalar_select %p29, 0, %s28
      %s31 = sadd.s32 1, %s22
      %s32 = scalar_select %p29, %s31, %s22
      %p33 = scmp.ge.s32.totalorder %s32, 2
      %s34 = scalar_select %p33, 0, %s32
      %s35 = ssub.s32 %s22, %s34
      %s36 = ssub.s32 %s23, %s30
      %s37 = sor.u32 %s35, %s36
      %p38 = scmp.eq.s32.totalorder %s37, 0
      %s40 = sadd.s32 %s39, 1
      %s41 = scalar_select %p38, %s39, %s40
      %p44 = pneg %p38
      %p45 = scmp.eq.s32.totalorder %s15, 1
      %p46 = por %p44, %p45
      %p47 = scmp.ne.s32.totalorder %s39, %s42
      %p48 = scmp.eq.s32.totalorder %s15, 0
      %p49 = por %p47, %p48
      %p50 = scmp.ne.s32.totalorder %s39, %s42
      %p51 = scmp.eq.s32.totalorder %s20, 1
      %p52 = por %p50, %p51
      %p53 = scmp.ne.s32.totalorder %s42, %s43
      %p54 = scmp.eq.s32.totalorder %s20, 0
      %p55 = por %p53, %p54
      %p56 = scmp.ne.s32.totalorder %s42, %s43
      %p57 = scmp.eq.s32.totalorder %s21, 1
      %p58 = por %p56, %p57
      %p60 = scmp.ne.s32.totalorder %s43, %s59
      %p61 = scmp.eq.s32.totalorder %s21, 0
      %p62 = por %p60, %p61
      %s64 = sadd.s32 %s63, 1
      %p67 = scmp.eq.s32.totalorder %s15, 1
      %p68 = scmp.ne.s32.totalorder %s63, %s65
      %p69 = scmp.eq.s32.totalorder %s15, 0
      %p70 = por %p68, %p69
      %p71 = scmp.ne.s32.totalorder %s63, %s65
      %p72 = scmp.eq.s32.totalorder %s20, 1
      %p73 = por %p71, %p72
      %p74 = scmp.ne.s32.totalorder %s65, %s66
      %p75 = scmp.eq.s32.totalorder %s20, 0
      %p76 = por %p74, %p75
      %p77 = scmp.ne.s32.totalorder %s65, %s66
      %p78 = scmp.eq.s32.totalorder %s21, 1
      %p79 = por %p77, %p78
      %p81 = scmp.ne.s32.totalorder %s66, %s80
      %p82 = scmp.eq.s32.totalorder %s21, 0
      %p83 = por %p81, %p82
      %s84 = ssub.s32 %s22, %s34
      %s85 = ssub.s32 %s23, %s30
      %s86 = sor.u32 %s84, %s85
      %p87 = scmp.eq.s32.totalorder %s86, 0
      %s89 = sadd.s32 %s88, 1
      %s90 = scalar_select %p87, %s88, %s89
      %p93 = pneg %p87
      %p94 = scmp.eq.s32.totalorder %s15, 1
      %p95 = por %p93, %p94
      %p96 = scmp.ne.s32.totalorder %s88, %s91
      %p97 = scmp.eq.s32.totalorder %s15, 0
      %p98 = por %p96, %p97
      %p99 = scmp.ne.s32.totalorder %s88, %s91
      %p100 = scmp.eq.s32.totalorder %s20, 1
      %p101 = por %p99, %p100
      %p102 = scmp.ne.s32.totalorder %s91, %s92
      %p103 = scmp.eq.s32.totalorder %s20, 0
      %p104 = por %p102, %p103
      %p105 = scmp.ne.s32.totalorder %s91, %s92
      %p106 = scmp.eq.s32.totalorder %s21, 1
      %p107 = por %p105, %p106
      %p109 = scmp.ne.s32.totalorder %s92, %s108
      %p110 = scmp.eq.s32.totalorder %s21, 0
      %p111 = por %p109, %p110
      %p112 = scmp.le.s32.totalorder 1, %s15
      %p113 = scmp.lt.s32.totalorder %s15, 3
      %p114 = pnand %p112, %p113
      %p115 = pneg %p114
      // Predicated region
      $region9: #{tpu_custom_call.1} parent=5 // pred_check
        _
      $region10: #{tpu_custom_call.1} parent=5 // pred_check_branch
        %117 = sbr.rel (%p114) target = $region12
      $region11: #{tpu_custom_call.1} parent=5 // pred_region
        %s118 = ssub.s32 %s15, 1
        // Predicated region
        $region13: #{tpu_custom_call.1} parent=11 // pred_check
          %p119 = pneg %p76
        $region14: #{tpu_custom_call.1} parent=11 // pred_check_branch
          %121 = sbr.rel (%p119) target = $region16
        $region15: #{tpu_custom_call.1} parent=11 // pred_region
          %s123 = ssub.s32 512, 512
          %124 = vsyncadd [#allocation6], %s123
          %s125 = sshll.u32 [#allocation5], 4
          %s126 = int_to_ptr.vmem [resolvable:$true] %s125
          %131 = dma.hbm_to_vmem [thread:$0]  %s1, 512, %s126, [#allocation6], 128, 128, 8
        $region16: #{tpu_custom_call.1} parent=11 // pred_fallthru
          _
      $region12: #{tpu_custom_call.1} parent=5 // pred_fallthru
        _
      %p132 = scmp.lt.s32.totalorder %s15, 2
      // Predicated region
      $region17: #{tpu_custom_call.1} parent=5 // pred_check
        %p133 = pneg %p132
      $region18: #{tpu_custom_call.1} parent=5 // pred_check_branch
        %135 = sbr.rel (%p133) target = $region20
      $region19: #{tpu_custom_call.1} parent=5 // pred_region
        // Predicated region
        $region21: #{tpu_custom_call.1} parent=19 // pred_check
          %p136 = pneg %p49
        $region22: #{tpu_custom_call.1} parent=19 // pred_check_branch
          %138 = sbr.rel (%p136) target = $region24
        $region23: #{tpu_custom_call.1} parent=19 // pred_region
          %s139 = sand.u32 %s39, 1
          %s140 = scalar_lea.sflag [#allocation3], %s139
          %s141 = sand.u32 %s39, 1
          %s142 = smul.addr %s141, 8
          %s143 = scalar_lea.vmem [#allocation2], %s142
          %s145 = ssub.s32 128, 128
          %146 = vsyncadd %s140, %s145
          %s147 = sadd.s32 %s23, %s22
          %s148 = smul.addr %s147, 128
          %s149 = scalar_lea.hbm %s0, %s148
          %s151 = sshll.u32 %s143, 4
          %s152 = int_to_ptr.vmem [resolvable:$true] %s151
          %154 = dma.hbm_to_vmem [thread:$0]  %s149, 128, %s152, %s140
        $region24: #{tpu_custom_call.1} parent=19 // pred_fallthru
          _
      $region20: #{tpu_custom_call.1} parent=5 // pred_fallthru
        _
      %p155 = scmp.le.s32.totalorder 1, %s15
      %p156 = scmp.lt.s32.totalorder %s15, 3
      %p157 = pnand %p155, %p156
      %p158 = pneg %p157
      // Predicated region
      $region25: #{tpu_custom_call.1} parent=5 // pred_check
        _
      $region26: #{tpu_custom_call.1} parent=5 // pred_check_branch
        %160 = sbr.rel (%p157) target = $region28
      $region27: #{tpu_custom_call.1} parent=5 // pred_region
        %s161 = ssub.s32 %s15, 1
        %s162 = sand.u32 %s42, 1
        %s163 = scalar_lea.sflag [#allocation3], %s162
        %s164 = sand.u32 %s42, 1
        %s165 = smul.addr %s164, 8
        %s166 = scalar_lea.vmem [#allocation2], %s165
        // Predicated region
        $region29: #{tpu_custom_call.1} parent=27 // pred_check
          %p167 = pneg %p55
        $region30: #{tpu_custom_call.1} parent=27 // pred_check_branch
          %169 = sbr.rel (%p167) target = $region32
        $region31: #{tpu_custom_call.1} parent=27 // pred_region
          %170 = dma.done %s163, 128
        $region32: #{tpu_custom_call.1} parent=27 // pred_fallthru
          _
        // Predicated region
        $region33: #{tpu_custom_call.1} parent=27 // pred_check
          %p171 = pneg %p76
        $region34: #{tpu_custom_call.1} parent=27 // pred_check_branch
          %173 = sbr.rel (%p171) target = $region36
        $region35: #{tpu_custom_call.1} parent=27 // pred_region
          %174 = dma.done [#allocation6], 512
        $region36: #{tpu_custom_call.1} parent=27 // pred_fallthru
          _
        %s175 = sand.u32 %s42, 1
        %s176 = scalar_lea.sflag [#allocation3], %s175
        %s177 = sand.u32 %s42, 1
        %s178 = smul.addr %s177, 8
        %s179 = scalar_lea.vmem [#allocation2], %s178
        %p180 = pneg %p55
        %p181 = pneg %p52
        %p182 = pneg %p76
        %p183 = pneg %p73
        %p184 = pneg %p104
        %p185 = pneg %p101
        %s186 = sand.u32 %s91, 1
        %s187 = scalar_lea.sflag [#allocation4], %s186
        %s188 = sand.u32 %s91, 1
        %s189 = smul.addr %s188, 8
        %s190 = scalar_lea.vmem [#allocation7], %s189
        %v191 = vld [vmem:[%s166] sm:$0xff]
        %v192 = vld [vmem:[#allocation5] sm:$0xff]
        %v193 = vld [vmem:[#allocation5 + $0x8] sm:$0xff]
        %v194 = vld [vmem:[#allocation5 + $0x10] sm:$0xff]
        %v195 = vld [vmem:[#allocation5 + $0x18] sm:$0xff]
        %vm196 = vcmask 261120
        %v198 = vsel %vm196, %v191, 0
        %200 = vmatprep.subr.mxu0 0.0
        %201 = vmatpush1.msra.mxu0 %v192
        %202 = vmatprep.subr.mxu0 0.0
        %203 = vmatpush1.msra.mxu0 %v193
        %204 = vmatprep.subr.mxu0 0.0
        %205 = vmatpush1.msra.mxu0 %v194
        %206 = vmatprep.subr.mxu0 0.0
        %207 = vmatpush1.msra.mxu0 %v195
        %208 = vmatprep.subr.mxu0 0.0
        %209 = vmatpush1.msra.mxu0 0.0
        %210 = vmatprep.subr.mxu0 0.0
        %211 = vmatpush1.msra.mxu0 0.0
        %212 = vmatprep.subr.mxu0 0.0
        %213 = vmatpush1.msra.mxu0 0.0
        %214 = vmatprep.subr.mxu0 0.0
        %215 = vmatpush1.msra.mxu0 0.0
        %216 = vmatprep.subr.mxu0 0.0
        %217 = vmatpush1.msra.mxu0 0.0
        %218 = vmatprep.subr.mxu0 0.0
        %219 = vmatpush1.msra.mxu0 0.0
        %220 = vmatprep.subr.mxu0 0.0
        %221 = vmatpush1.msra.mxu0 0.0
        %222 = vmatprep.subr.mxu0 0.0
        %223 = vmatpush1.msra.mxu0 0.0
        %224 = vmatprep.subr.mxu0 0.0
        %225 = vmatpush1.msra.mxu0 0.0
        %226 = vmatprep.subr.mxu0 0.0
        %227 = vmatpush1.msra.mxu0 0.0
        %228 = vmatprep.subr.mxu0 0.0
        %229 = vmatpush1.msra.mxu0 0.0
        %230 = vmatprep.subr.mxu0 0.0
        %231 = vmatpush1.msra.mxu0 0.0
        %232 = vmatprep.subr.mxu0 0.0
        %233 = vmatpush1.msra.mxu0 0.0
        %234 = vmatprep.subr.mxu0 0.0
        %235 = vmatpush1.msra.mxu0 0.0
        %236 = vmatprep.subr.mxu0 0.0
        %237 = vmatpush1.msra.mxu0 0.0
        %238 = vmatprep.subr.mxu0 0.0
        %239 = vmatpush1.msra.mxu0 0.0
        %240 = vmatprep.subr.mxu0 0.0
        %241 = vmatpush1.msra.mxu0 0.0
        %242 = vmatprep.subr.mxu0 0.0
        %243 = vmatpush1.msra.mxu0 0.0
        %244 = vmatprep.subr.mxu0 0.0
        %245 = vmatpush1.msra.mxu0 0.0
        %246 = vmatprep.subr.mxu0 0.0
        %247 = vmatpush1.msra.mxu0 0.0
        %248 = vmatprep.subr.mxu0 0.0
        %249 = vmatpush1.msra.mxu0 0.0
        %250 = vmatprep.subr.mxu0 0.0
        %251 = vmatpush1.msra.mxu0 0.0
        %252 = vmatprep.subr.mxu0 0.0
        %253 = vmatpush1.msra.mxu0 0.0
        %254 = vmatprep.subr.mxu0 0.0
        %255 = vmatpush1.msra.mxu0 0.0
        %256 = vmatprep.subr.mxu0 0.0
        %257 = vmatpush1.msra.mxu0 0.0
        %258 = vmatprep.subr.mxu0 0.0
        %259 = vmatpush1.msra.mxu0 0.0
        %260 = vmatprep.subr.mxu0 0.0
        %261 = vmatpush1.msra.mxu0 0.0
        %262 = vmatprep.subr.mxu0 0.0
        %263 = vmatpush1.msra.mxu0 0.0
        %264 = vmatprep.mubr.f32.mxu0 0.0
        %265 = vmatmul.mubr.f32.gmra.mrb[0].mxu0 %v198
        %v266 = vpop.f32.mrb[0].mxu0
        %v267 = vadd.f32 0.0, %v266
        %v268 = vpop.f32.mrb[0].mxu0
        %269 = vdwg.mxu0
        %270 = vst [vmem:[%s190] sm:$0xff] %v267
        %s271 = sand.u32 %s91, 1
        %s272 = scalar_lea.sflag [#allocation4], %s271
        %s273 = sand.u32 %s91, 1
        %s274 = smul.addr %s273, 8
        %s275 = scalar_lea.vmem [#allocation7], %s274
        // Predicated region
        $region37: #{tpu_custom_call.1} parent=27 // pred_check
          %p276 = pneg %p101
        $region38: #{tpu_custom_call.1} parent=27 // pred_check_branch
          %278 = sbr.rel (%p276) target = $region40
        $region39: #{tpu_custom_call.1} parent=27 // pred_region
          %s280 = ssub.s32 128, 128
          %281 = vsyncadd %s272, %s280
          %s282 = sadd.s32 %s25, %s24
          %s283 = smul.addr %s282, 128
          %s284 = scalar_lea.hbm %s2, %s283
          %s286 = sshll.u32 %s275, 4
          %s287 = int_to_ptr.vmem [resolvable:$true] %s286
          %289 = dma.vmem_to_hbm [thread:$0]  %s287, 128, %s284, %s272
        $region40: #{tpu_custom_call.1} parent=27 // pred_fallthru
          _
      $region28: #{tpu_custom_call.1} parent=5 // pred_fallthru
        _
      %p290 = scmp.le.s32.totalorder 2, %s15
      // Predicated region
      $region41: #{tpu_custom_call.1} parent=5 // pred_check
        %p291 = pneg %p290
      $region42: #{tpu_custom_call.1} parent=5 // pred_check_branch
        %293 = sbr.rel (%p291) target = $region44
      $region43: #{tpu_custom_call.1} parent=5 // pred_region
        %s294 = ssub.s32 %s15, 2
        // Predicated region
        $region45: #{tpu_custom_call.1} parent=43 // pred_check
          %p295 = pneg %p107
        $region46: #{tpu_custom_call.1} parent=43 // pred_check_branch
          %297 = sbr.rel (%p295) target = $region48
        $region47: #{tpu_custom_call.1} parent=43 // pred_region
          %s298 = sand.u32 %s92, 1
          %s299 = scalar_lea.sflag [#allocation4], %s298
          %s300 = sand.u32 %s92, 1
          %s301 = smul.addr %s300, 8
          %s302 = scalar_lea.vmem [#allocation7], %s301
          %303 = dma.done %s299, 128
        $region48: #{tpu_custom_call.1} parent=43 // pred_fallthru
          _
      $region44: #{tpu_custom_call.1} parent=5 // pred_fallthru
        _
    $region6: #{tpu_custom_call.1} parent=1 // loop_footer
      %s19 = sadd.s32 1, %s15
    $region7: #{tpu_custom_call.1} parent=1 // loop_footer_branch
      %14 = sbr.rel target = $region3
    $region8: #{tpu_custom_call.1} parent=1 // loop_exit
      _
    %304 = vsyncpa [#allocation3], 1
    %s305 = scalar_lea.sflag [#allocation3], 1
    %306 = vsyncpa %s305, 1
    %307 = vsyncpa [#allocation6], 1
    %308 = vsyncpa [#allocation4], 1
    %s309 = scalar_lea.sflag [#allocation4], 1
    %310 = vsyncpa %s309, 1

</llo_original>
